<compile_context>
chip_gen: v7x
topology: tpu7x:2x2x1
jax: 0.10.0
libtpu: 0.0.40
codegen_flags: <defaults>
</compile_context>

<pallas_src>
import functools
import math

import jax
import jax.numpy as jnp
from jax.experimental import pallas as pl
from jax.experimental.pallas import tpu as pltpu

_INV_SQRT2 = 1.0 / math.sqrt(2.0)
_SQRT_2_OVER_PI = math.sqrt(2.0 / math.pi)


def _gelu_exact(x):
    # nn.GELU() default: exact erf GELU, evaluated in f32.
    return 0.5 * x * (1.0 + jax.lax.erf(x * _INV_SQRT2))


def _gelu_tanh(x):
    # tanh approximation: tanh lowers to the EUP slot (free next to MXU / VALU).
    return 0.5 * x * (1.0 + jnp.tanh(_SQRT_2_OVER_PI * (x + 0.044715 * x * x * x)))


# ---------------------------------------------------------------------------
# Kernels
# ---------------------------------------------------------------------------

def mlp_kernel_resident(x_ref, w1_ref, b1_ref, w2_ref, b2_ref, o_ref, *, gelu_fn):
    """Grid = (M_tiles,).  Full W1/W2 resident in VMEM (constant index_map)."""
    h = jnp.dot(x_ref[...], w1_ref[...], preferred_element_type=jnp.float32)
    h = gelu_fn(h + b1_ref[...])                     # f32 bias + GELU
    o = jnp.dot(h.astype(w2_ref.dtype), w2_ref[...],
                preferred_element_type=jnp.float32)
    o_ref[...] = (o + b2_ref[...]).astype(o_ref.dtype)


def mlp_kernel_htiled(x_ref, w1_ref, b1_ref, w2_ref, b2_ref, o_ref, acc_ref, *,
                      gelu_fn):
    """Grid = (M_tiles, H_tiles).  Hidden axis is a reduction into an f32 acc."""
    h_idx = pl.program_id(1)

    h = jnp.dot(x_ref[...], w1_ref[...], preferred_element_type=jnp.float32)
    h = gelu_fn(h + b1_ref[...])
    partial = jnp.dot(h.astype(w2_ref.dtype), w2_ref[...],
                      preferred_element_type=jnp.float32)

    # Direct write on step 0: saves a full (tile_m, D) f32 zero-store plus a
    # load+add per M-tile compared to zero-init + "+=".
    @pl.when(h_idx == 0)
    def _first():
        acc_ref[...] = partial

    @pl.when(h_idx != 0)
    def _rest():
        acc_ref[...] += partial

    @pl.when(h_idx == pl.num_programs(1) - 1)
    def _finalize():
        o_ref[...] = (acc_ref[...] + b2_ref[...]).astype(o_ref.dtype)


# ---------------------------------------------------------------------------
# Tiling / footprint helpers
# ---------------------------------------------------------------------------

def _pick_tile(n, preferred, align):
    """Largest tile <= preferred that divides n, preferring multiples of align."""
    if n <= preferred:
        return n
    t = (preferred // align) * align
    while t >= align:
        if n % t == 0:
            return t
        t -= align
    t = min(preferred, n)
    while n % t != 0:
        t -= 1
    return t


def _prefer_even_tiles(M, tile_m, align):
    """With few M tiles, prefer an even count so 2 TensorCores (v7x) split evenly."""
    n = M // tile_m
    if 1 < n < 8 and n % 2 == 1:
        t = tile_m - align
        while t >= align:
            if M % t == 0 and (M // t) % 2 == 0 and 2 * t >= tile_m:
                return t
            t -= align
    return tile_m


def _default_pref_m():
    """Per-generation M-tile target (arithmetic-intensity threshold when weights
    are re-streamed; modest on v5e which has a single vst slot)."""
    kind = ""
    try:
        kind = jax.devices()[0].device_kind.lower()
    except Exception:
        pass
    if "v5" in kind:
        return 256    # ~240 flops/byte threshold; don't oversize (1 vst slot)
    if "v6" in kind:
        return 1024   # ~650 flops/byte threshold (918 TF/s / ~1.4 TB/s)
    if "v7" in kind:
        return 512    # ~310 flops/byte per-TC threshold
    return 512


def _vmem_capacity_bytes():
    try:
        info = pltpu.get_tpu_info()
        cap = getattr(info, "vmem_capacity_bytes", None)
        if cap:
            return int(cap)
    except Exception:
        pass
    return 64 * 1024 * 1024  # conservative (v7x per-TC)


def _resident_footprint(tile_m, D, H, c_bytes, o_bytes):
    x_buf = 2 * tile_m * D * c_bytes                    # double-buffered x tile
    w_buf = 2 * (D * H + H * D) * c_bytes               # weights (conservative 2x)
    b_buf = 2 * (H + D) * 4
    o_buf = 2 * tile_m * D * o_bytes
    interm = tile_m * H * (4 + c_bytes) + tile_m * D * 4  # f32 h + bf16 copy + f32 o
    return x_buf + w_buf + b_buf + o_buf + interm


def _htiled_footprint(tile_m, tile_h, D, c_bytes, o_bytes):
    x_buf = 2 * tile_m * D * c_bytes
    w_buf = 2 * (D * tile_h + tile_h * D) * c_bytes
    b_buf = 2 * (tile_h + D) * 4
    o_buf = 2 * tile_m * D * o_bytes
    acc = tile_m * D * 4
    interm = tile_m * tile_h * (4 + c_bytes) + tile_m * D * 4
    return x_buf + w_buf + b_buf + o_buf + acc + interm


def _vmem_limit(footprint_bytes, vmem_cap):
    # footprint + ~25% headroom for compiler-internal scratch, >= 4 MiB, <= capacity.
    return int(min(vmem_cap, max(footprint_bytes * 5 // 4, 4 * 1024 * 1024)))


# ---------------------------------------------------------------------------
# Wrapper
# ---------------------------------------------------------------------------

def mlp_forward(x, w_fc, b_fc, w_proj, b_proj, *,
                compute_dtype=jnp.bfloat16, out_dtype=None,
                tile_m=None, tile_h=None, approx_gelu=False):
    """x: (B, S, D). w_fc: (D, 4D), b_fc: (4D,), w_proj: (4D, D), b_proj: (D,)."""
    B, S, D = x.shape
    H = w_fc.shape[1]
    M = B * S
    if out_dtype is None:
        out_dtype = x.dtype

    c_bytes = jnp.dtype(compute_dtype).itemsize
    o_bytes = jnp.dtype(out_dtype).itemsize
    align_m = 16 if c_bytes == 2 else 8          # sublane packing
    vmem_cap = _vmem_capacity_bytes()
    budget = int(0.70 * vmem_cap)                # headroom for compiler scratch

    # --- tile_m selection --------------------------------------------------
    if tile_m is None:
        pref_m = _default_pref_m()
        if M >= 2 * align_m:
            # keep >= 2 M-tiles so both v7x TensorCores get work
            pref_m = min(pref_m, max(align_m, (M // 2) // align_m * align_m))
        tile_m = _pick_tile(M, pref_m, align_m)
        tile_m = _prefer_even_tiles(M, tile_m, align_m)
    assert M % tile_m == 0, "tile_m must divide batch*seq"

    gelu_fn = _gelu_tanh if approx_gelu else _gelu_exact

    # --- dtype plumbing: bf16 MXU inputs, f32 accumulation / biases ---------
    # (no-ops if x / weights are already stored in compute_dtype)
    x2 = x.reshape(M, D).astype(compute_dtype)
    w1 = w_fc.astype(compute_dtype)
    w2 = w_proj.astype(compute_dtype)
    b1 = b_fc.reshape(1, H).astype(jnp.float32)
    b2 = b_proj.reshape(1, D).astype(jnp.float32)

    use_resident = (tile_h is None and
                    _resident_footprint(tile_m, D, H, c_bytes, o_bytes) <= budget)

    if use_resident:
        # ------------------ weight-resident path (grid over M only) --------
        footprint = _resident_footprint(tile_m, D, H, c_bytes, o_bytes)
        cost = pl.CostEstimate(
            flops=4 * M * D * H,
            transcendentals=M * H,
            bytes_accessed=int(M * D * c_bytes + 2 * D * H * c_bytes
                               + (H + D) * 4 + M * D * o_bytes),
        )
        out2 = pl.pallas_call(
            functools.partial(mlp_kernel_resident, gelu_fn=gelu_fn),
            out_shape=jax.ShapeDtypeStruct((M, D), out_dtype),
            grid_spec=pltpu.PrefetchScalarGridSpec(
                num_scalar_prefetch=0,
                grid=(M // tile_m,),
                in_specs=[
                    pl.BlockSpec((tile_m, D), lambda i: (i, 0)),   # x tile
                    pl.BlockSpec((D, H), lambda i: (0, 0)),        # W1 (resident)
                    pl.BlockSpec((1, H), lambda i: (0, 0)),        # b1 (f32)
                    pl.BlockSpec((H, D), lambda i: (0, 0)),        # W2 (resident)
                    pl.BlockSpec((1, D), lambda i: (0, 0)),        # b2 (f32)
                ],
                out_specs=pl.BlockSpec((tile_m, D), lambda i: (i, 0)),
            ),
            compiler_params=pltpu.CompilerParams(
                dimension_semantics=("parallel",),
                vmem_limit_bytes=_vmem_limit(footprint, vmem_cap),
            ),
            cost_estimate=cost,
        )(x2, w1, b1, w2, b2)
        return out2.reshape(B, S, D)

    # ---------------------- H-tiled reduction fallback ----------------------
    if tile_h is None:
        tile_h = _pick_tile(H, 2048, 128)
        while (tile_h > 128 and
               _htiled_footprint(tile_m, tile_h, D, c_bytes, o_bytes) > budget):
            new_th = _pick_tile(H, max(128, tile_h // 2), 128)
            if new_th >= tile_h:
                break
            tile_h = new_th
    assert H % tile_h == 0, "tile_h must divide hidden dim"
    # TODO(synk): on v5e, consider pipeline_mode=pl.Buffered(3) on the W1/W2
    # specs to hide weight-slice DMA if the trace still shows it exposed.

    m_tiles = M // tile_m
    footprint = _htiled_footprint(tile_m, tile_h, D, c_bytes, o_bytes)
    cost = pl.CostEstimate(
        flops=4 * M * D * H,
        transcendentals=M * H,
        bytes_accessed=int(M * D * c_bytes
                           + m_tiles * (2 * D * H * c_bytes + H * 4)  # re-streamed
                           + D * 4 + M * D * o_bytes),
    )
    out2 = pl.pallas_call(
        functools.partial(mlp_kernel_htiled, gelu_fn=gelu_fn),
        out_shape=jax.ShapeDtypeStruct((M, D), out_dtype),
        grid_spec=pltpu.PrefetchScalarGridSpec(
            num_scalar_prefetch=0,
            grid=(m_tiles, H // tile_h),
            in_specs=[
                pl.BlockSpec((tile_m, D), lambda i, h: (i, 0)),    # x (resident over h)
                pl.BlockSpec((D, tile_h), lambda i, h: (0, h)),    # W1 slice
                pl.BlockSpec((1, tile_h), lambda i, h: (0, h)),    # b1 slice (f32)
                pl.BlockSpec((tile_h, D), lambda i, h: (h, 0)),    # W2 slice
                pl.BlockSpec((1, D), lambda i, h: (0, 0)),         # b2 (f32)
            ],
            out_specs=pl.BlockSpec((tile_m, D), lambda i, h: (i, 0)),
            scratch_shapes=[pltpu.VMEM((tile_m, D), jnp.float32)],  # f32 accumulator
        ),
        compiler_params=pltpu.CompilerParams(
            dimension_semantics=("parallel", "arbitrary"),
            vmem_limit_bytes=_vmem_limit(footprint, vmem_cap),
        ),
        cost_estimate=cost,
    )(x2, w1, b1, w2, b2)
    return out2.reshape(B, S, D)


# ---------------------------------------------------------------------------
# Reference + test
# ---------------------------------------------------------------------------

def reference_mlp(x, w_fc, b_fc, w_proj, b_proj):
    h = jnp.einsum("bsd,dh->bsh", x, w_fc) + b_fc
    h = 0.5 * h * (1.0 + jax.lax.erf(h / jnp.sqrt(2.0)))
    o = jnp.einsum("bsh,hd->bsd", h, w_proj) + b_proj
    return o  # dropout == identity at eval time


def _make_params(key, D, H):
    k1, k2, k3, k4 = jax.random.split(key, 4)
    # PyTorch nn.Linear stores weight as (out, in); we materialize (in, out)
    # directly for the kernel. U(-1/sqrt(in), 1/sqrt(in)) init.
    w_fc = jax.random.uniform(k1, (D, H), minval=-1.0 / math.sqrt(D),
                              maxval=1.0 / math.sqrt(D), dtype=jnp.float32)
    b_fc = jax.random.uniform(k2, (H,), minval=-1.0 / math.sqrt(D),
                              maxval=1.0 / math.sqrt(D), dtype=jnp.float32)
    w_proj = jax.random.uniform(k3, (H, D), minval=-1.0 / math.sqrt(H),
                                maxval=1.0 / math.sqrt(H), dtype=jnp.float32)
    b_proj = jax.random.uniform(k4, (D,), minval=-1.0 / math.sqrt(H),
                                maxval=1.0 / math.sqrt(H), dtype=jnp.float32)
    return w_fc, b_fc, w_proj, b_proj


if __name__ == "__main__":
    key = jax.random.PRNGKey(0)
    kx1, kp1, kx2, kp2 = jax.random.split(key, 4)

    # ---- Test 1: small ModelArgs-consistent shapes (dim=32 -> hidden=128) ----
    B, S, D = 2, 8, 32
    H = 4 * D
    x = jax.random.normal(kx1, (B, S, D), dtype=jnp.float32)
    w_fc, b_fc, w_proj, b_proj = _make_params(kp1, D, H)
    ref = reference_mlp(x, w_fc, b_fc, w_proj, b_proj)

    # Default fast path: bf16 MXU inputs, f32 accumulation (weight-resident).
    out_bf16 = jax.block_until_ready(mlp_forward(x, w_fc, b_fc, w_proj, b_proj))
    assert out_bf16.shape == (B, S, D)
    assert jnp.allclose(out_bf16, ref, atol=2e-2, rtol=2e-2), "bf16 path mismatch"

    # f32 path: tight numerical check against the exact reference.
    out_f32 = jax.block_until_ready(
        mlp_forward(x, w_fc, b_fc, w_proj, b_proj, compute_dtype=jnp.float32))
    assert jnp.allclose(out_f32, ref, atol=1e-5, rtol=1e-5), "f32 path mismatch"

    # tanh-approx GELU flag (EUP) — loose tolerance vs exact-erf reference.
    out_tanh = jax.block_until_ready(
        mlp_forward(x, w_fc, b_fc, w_proj, b_proj, approx_gelu=True))
    assert jnp.allclose(out_tanh, ref, atol=5e-2, rtol=5e-2), "tanh-gelu path mismatch"

    # ---- Test 2: exercise the H-tiled reduction fallback explicitly ----
    D2 = 64
    H2 = 4 * D2
    x2 = jax.random.normal(kx2, (B, S, D2), dtype=jnp.float32)
    p2 = _make_params(kp2, D2, H2)
    ref2 = reference_mlp(x2, *p2)
    out_ht = jax.block_until_ready(
        mlp_forward(x2, *p2, compute_dtype=jnp.float32, tile_h=128))
    assert jnp.allclose(out_ht, ref2, atol=1e-5, rtol=1e-5), "H-tiled path mismatch"

    print("KERNEL_OK")
</pallas_src>

<mosaic_0001>
module attributes {stable_mosaic.version = 11 : i64} {
  func.func @mlp_kernel_resident(%arg0: i32, %arg1: memref<16x32xbf16, #tpu.memory_space<vmem>>, %arg2: memref<32x128xbf16, #tpu.memory_space<vmem>>, %arg3: memref<1x128xf32, #tpu.memory_space<vmem>>, %arg4: memref<128x32xbf16, #tpu.memory_space<vmem>>, %arg5: memref<1x32xf32, #tpu.memory_space<vmem>>, %arg6: memref<16x32xf32, #tpu.memory_space<vmem>>) attributes {dimension_semantics = [#tpu.dimension_semantics<parallel>], iteration_bounds = array<i64: 1>, scalar_prefetch = 0 : i64, scratch_operands = 0 : i64, tpu.core_type = #tpu.core_type<tc>, window_params = [{transform_indices = @transform_0, window_bounds = array<i64: 16, 32>}, {pipeline_mode = #tpu.pipeline_mode<synchronous>, transform_indices = @transform_1, window_bounds = array<i64: 32, 128>}, {pipeline_mode = #tpu.pipeline_mode<synchronous>, transform_indices = @transform_2, window_bounds = array<i64: 1, 128>}, {pipeline_mode = #tpu.pipeline_mode<synchronous>, transform_indices = @transform_3, window_bounds = array<i64: 128, 32>}, {pipeline_mode = #tpu.pipeline_mode<synchronous>, transform_indices = @transform_4, window_bounds = array<i64: 1, 32>}, {transform_indices = @transform_5, window_bounds = array<i64: 16, 32>}]} {
    %c0 = arith.constant 0 : index
    %c0_0 = arith.constant 0 : index
    %0 = vector.load %arg1[%c0, %c0_0] : memref<16x32xbf16, #tpu.memory_space<vmem>>, vector<16x32xbf16>
    %c0_1 = arith.constant 0 : index
    %c0_2 = arith.constant 0 : index
    %1 = vector.load %arg2[%c0_1, %c0_2] : memref<32x128xbf16, #tpu.memory_space<vmem>>, vector<32x128xbf16>
    %cst = arith.constant dense<0.000000e+00> : vector<16x128xf32>
    %2 = tpu.matmul %0, %1, %cst {dimension_numbers = #tpu.dot_dimension_numbers<[1], [0], [0], [1], [0, 0, 1, 1], [], []>} : vector<16x32xbf16>, vector<32x128xbf16>, vector<16x128xf32> -> vector<16x128xf32>
    %c0_3 = arith.constant 0 : index
    %c0_4 = arith.constant 0 : index
    %3 = vector.load %arg3[%c0_3, %c0_4] : memref<1x128xf32, #tpu.memory_space<vmem>>, vector<1x128xf32>
    %4 = vector.broadcast %3 : vector<1x128xf32> to vector<16x128xf32>
    %5 = arith.addf %2, %4 : vector<16x128xf32>
    %cst_5 = arith.constant 5.000000e-01 : f32
    %6 = vector.broadcast %cst_5 : f32 to vector<16x128xf32>
    %7 = arith.mulf %6, %5 : vector<16x128xf32>
    %cst_6 = arith.constant 0.707106769 : f32
    %8 = vector.broadcast %cst_6 : f32 to vector<16x128xf32>
    %9 = arith.mulf %5, %8 : vector<16x128xf32>
    %10 = math.erf %9 : vector<16x128xf32>
    %cst_7 = arith.constant 1.000000e+00 : f32
    %11 = vector.broadcast %cst_7 : f32 to vector<16x128xf32>
    %12 = arith.addf %11, %10 : vector<16x128xf32>
    %13 = arith.mulf %7, %12 : vector<16x128xf32>
    %14 = arith.truncf %13 : vector<16x128xf32> to vector<16x128xbf16>
    %c0_8 = arith.constant 0 : index
    %c0_9 = arith.constant 0 : index
    %15 = vector.load %arg4[%c0_8, %c0_9] : memref<128x32xbf16, #tpu.memory_space<vmem>>, vector<128x32xbf16>
    %cst_10 = arith.constant dense<0.000000e+00> : vector<16x32xf32>
    %16 = tpu.matmul %14, %15, %cst_10 {dimension_numbers = #tpu.dot_dimension_numbers<[1], [0], [0], [1], [0, 0, 1, 1], [], []>} : vector<16x128xbf16>, vector<128x32xbf16>, vector<16x32xf32> -> vector<16x32xf32>
    %c0_11 = arith.constant 0 : index
    %c0_12 = arith.constant 0 : index
    %17 = vector.load %arg5[%c0_11, %c0_12] : memref<1x32xf32, #tpu.memory_space<vmem>>, vector<1x32xf32>
    %18 = vector.broadcast %17 : vector<1x32xf32> to vector<16x32xf32>
    %19 = arith.addf %16, %18 : vector<16x32xf32>
    %c0_13 = arith.constant 0 : index
    %c0_14 = arith.constant 0 : index
    %20 = vector.load %arg6[%c0_13, %c0_14] : memref<16x32xf32, #tpu.memory_space<vmem>>, vector<16x32xf32>
    tpu.vector_store %arg6[%c0_13, %c0_14], %19 {strides = array<i32>} : memref<16x32xf32, #tpu.memory_space<vmem>>, vector<16x32xf32>,
    return
  }
  func.func @transform_0(%arg0: i32) -> (i32, i32) {
    %c0_i32 = arith.constant 0 : i32
    %c0_i32_0 = arith.constant 0 : i32
    return %arg0, %c0_i32 : i32, i32
  }
  func.func @transform_1(%arg0: i32) -> (i32, i32) {
    %c0_i32 = arith.constant 0 : i32
    %c0_i32_0 = arith.constant 0 : i32
    %c0_i32_1 = arith.constant 0 : i32
    return %c0_i32, %c0_i32_0 : i32, i32
  }
  func.func @transform_2(%arg0: i32) -> (i32, i32) {
    %c0_i32 = arith.constant 0 : i32
    %c0_i32_0 = arith.constant 0 : i32
    %c0_i32_1 = arith.constant 0 : i32
    return %c0_i32, %c0_i32_0 : i32, i32
  }
  func.func @transform_3(%arg0: i32) -> (i32, i32) {
    %c0_i32 = arith.constant 0 : i32
    %c0_i32_0 = arith.constant 0 : i32
    %c0_i32_1 = arith.constant 0 : i32
    return %c0_i32, %c0_i32_0 : i32, i32
  }
  func.func @transform_4(%arg0: i32) -> (i32, i32) {
    %c0_i32 = arith.constant 0 : i32
    %c0_i32_0 = arith.constant 0 : i32
    %c0_i32_1 = arith.constant 0 : i32
    return %c0_i32, %c0_i32_0 : i32, i32
  }
  func.func @transform_5(%arg0: i32) -> (i32, i32) {
    %c0_i32 = arith.constant 0 : i32
    %c0_i32_0 = arith.constant 0 : i32
    return %arg0, %c0_i32 : i32, i32
  }
}

</mosaic_0001>

<llo_original>
// kernel: tpu_custom_call.1
$region0: #{tpu_custom_call.1}
  #allocation0 [shape = 'u32[]', space=smem, size = 0x4, offset = 0x4, fixed_abs, tag = 'smem constant byte address 0x4 - core index']
  #allocation1 [shape = 'u32[144,128]{1,0:T(1,128)}', space=vmem, size = 0x12000, scoped, tag = 'internal scratch']
  %s0 = inlined_call_operand.vmem [shape: bf16[16,32], index: 0, kind: input, shape index: {}]
  %s1 = inlined_call_operand.vmem [shape: bf16[32,128], index: 1, kind: input, shape index: {}]
  %s2 = inlined_call_operand.vmem [shape: f32[1,128], index: 2, kind: input, shape index: {}]
  %s3 = inlined_call_operand.vmem [shape: bf16[128,32], index: 3, kind: input, shape index: {}]
  %s4 = inlined_call_operand.vmem [shape: f32[1,32], index: 4, kind: input, shape index: {}]
  %s5 = inlined_call_operand.hbm [shape: f32[16,32], index: 5, kind: output, shape index: {}]
  %s6 = sld [smem:[#allocation0]]
  $region30: #{tpu_custom_call.1} parent=0
    _
  %s8 = ssub.s32 1, %s6
  %s9 = scalar_select 0, %s8, %s6
  $region1: #{tpu_custom_call.1} parent=0
    #allocation2 [shape = 'u8[8192]{0}', space=vmem, size = 0x2000, scoped, tag = 'output window, operand 0, single buffered']
    #allocation3 [shape = 's32[1]{0}', space=sflag, size = 0x4, scoped, tag = 'scoped memory for tpu_custom_call.1']
    %10 = vsyncpa [#allocation3], 0
    // Predicated region
    $region2: #{tpu_custom_call.1} parent=1 // pred_check
      _
    $region3: #{tpu_custom_call.1} parent=1 // pred_check_branch
      %12 = sbr.rel (0) target = $region5
    $region4: #{tpu_custom_call.1} parent=1 // pred_region
      _
    $region5: #{tpu_custom_call.1} parent=1 // pred_fallthru
      _
    // Predicated region
    $region6: #{tpu_custom_call.1} parent=1 // pred_check
      _
    $region7: #{tpu_custom_call.1} parent=1 // pred_check_branch
      %14 = sbr.rel (0) target = $region9
    $region8: #{tpu_custom_call.1} parent=1 // pred_region
      _
    $region9: #{tpu_custom_call.1} parent=1 // pred_fallthru
      _
    // Predicated region
    $region10: #{tpu_custom_call.1} parent=1 // pred_check
      _
    $region11: #{tpu_custom_call.1} parent=1 // pred_check_branch
      %16 = sbr.rel (0) target = $region13
    $region12: #{tpu_custom_call.1} parent=1 // pred_region
      _
    $region13: #{tpu_custom_call.1} parent=1 // pred_fallthru
      _
    // Predicated region
    $region14: #{tpu_custom_call.1} parent=1 // pred_check
      _
    $region15: #{tpu_custom_call.1} parent=1 // pred_check_branch
      %18 = sbr.rel (0) target = $region17
    $region16: #{tpu_custom_call.1} parent=1 // pred_region
      _
    $region17: #{tpu_custom_call.1} parent=1 // pred_fallthru
      _
    // Predicated region
    $region18: #{tpu_custom_call.1} parent=1 // pred_check
      _
    $region19: #{tpu_custom_call.1} parent=1 // pred_check_branch
      %20 = sbr.rel (0) target = $region21
    $region20: #{tpu_custom_call.1} parent=1 // pred_region
      _
    $region21: #{tpu_custom_call.1} parent=1 // pred_fallthru
      _
    %v22 = vld [vmem:[%s0] sm:$0xf]
    %v23 = vld [vmem:[%s0 + $0x4] sm:$0xf]
    %v24 = vld [vmem:[%s1] sm:$0xf]
    %v25 = vld [vmem:[%s1 + $0x4] sm:$0xf]
    %v26 = vld [vmem:[%s1 + $0x8] sm:$0xf]
    %v27 = vld [vmem:[%s1 + $0xc] sm:$0xf]
    %v28 = vld [vmem:[%s2] sm:$0x1]
    %v30 = vlaneseq
    %v31 = vshrl.u32 %v30, 7
    %v32 = vsub.s32 0, %v31
    %v33 = vrot.slane %v28, %v32
    %v37 = vunpack.c.l.b16 %v22
    %v38 = vunpack.c.l.b16 %v23
    %v39 = vpack.c.b16 %v38, %v37
    %v44 = vunpack.c.l.b16 %v24
    %v45 = vunpack.c.l.b16 %v25
    %v46 = vunpack.c.l.b16 %v26
    %v47 = vunpack.c.l.b16 %v27
    %v48 = vpack.c.b16 %v45, %v44
    %v49 = vpack.c.b16 %v47, %v46
    %vm52 = vcmask 261120
    %v54 = vsel %vm52, %v39, 0
    %56 = vmatprep.subr.bf16.mxu0 0
    %57 = vmatpush1.bf16.msra.mxu0 %v48
    %58 = vmatprep.subr.bf16.mxu0 0
    %59 = vmatpush1.bf16.msra.mxu0 %v49
    %60 = vmatprep.subr.bf16.mxu0 0
    %61 = vmatpush1.bf16.msra.mxu0 0
    %62 = vmatprep.subr.bf16.mxu0 0
    %63 = vmatpush1.bf16.msra.mxu0 0
    %64 = vmatprep.subr.bf16.mxu0 0
    %65 = vmatpush1.bf16.msra.mxu0 0
    %66 = vmatprep.subr.bf16.mxu0 0
    %67 = vmatpush1.bf16.msra.mxu0 0
    %68 = vmatprep.subr.bf16.mxu0 0
    %69 = vmatpush1.bf16.msra.mxu0 0
    %70 = vmatprep.subr.bf16.mxu0 0
    %71 = vmatpush1.bf16.msra.mxu0 0
    %72 = vmatprep.subr.bf16.mxu0 0
    %73 = vmatpush1.bf16.msra.mxu0 0
    %74 = vmatprep.subr.bf16.mxu0 0
    %75 = vmatpush1.bf16.msra.mxu0 0
    %76 = vmatprep.subr.bf16.mxu0 0
    %77 = vmatpush1.bf16.msra.mxu0 0
    %78 = vmatprep.subr.bf16.mxu0 0
    %79 = vmatpush1.bf16.msra.mxu0 0
    %80 = vmatprep.subr.bf16.mxu0 0
    %81 = vmatpush1.bf16.msra.mxu0 0
    %82 = vmatprep.subr.bf16.mxu0 0
    %83 = vmatpush1.bf16.msra.mxu0 0
    %84 = vmatprep.subr.bf16.mxu0 0
    %85 = vmatpush1.bf16.msra.mxu0 0
    %86 = vmatprep.subr.bf16.mxu0 0
    %87 = vmatpush1.bf16.msra.mxu0 0
    %88 = vmatprep.mubr.bf16.mxu0 0
    %89 = vmatmul.mubr.bf16.gmra.mrb[0].mxu0 %v54
    %v90 = vpop.f32.mrb[0].mxu0
    %v91 = vadd.f32 %v33, %v90
    %v92 = vpop.f32.mrb[0].mxu0
    %v93 = vpop.f32.mrb[0].mxu0
    %v94 = vadd.f32 %v33, %v93
    %v95 = vpop.f32.mrb[0].mxu0
    %96 = vdwg.mxu0
    %v97 = vmul.f32 %v91, 0.5
    %v98 = vmul.f32 %v94, 0.5
    %v99 = vmul.f32 %v91, 0.70710677
    %v100 = vmul.f32 %v94, 0.70710677
    %v101 = verf.f32.pop %v99
    %v102 = verf.f32.pop %v100
    %v103 = vadd.f32 %v101, 1.0
    %v104 = vadd.f32 %v102, 1.0
    %v105 = vmul.f32 %v97, %v103
    %v106 = vmul.f32 %v98, %v104
    %v107 = vpack.c.bf16 %v106, %v105
    %v108 = vld [vmem:[%s3] sm:$0xf]
    %v109 = vld [vmem:[%s3 + $0x4] sm:$0xf]
    %v110 = vld [vmem:[%s3 + $0x8] sm:$0xf]
    %v111 = vld [vmem:[%s3 + $0xc] sm:$0xf]
    %v112 = vld [vmem:[%s3 + $0x10] sm:$0xf]
    %v113 = vld [vmem:[%s3 + $0x14] sm:$0xf]
    %v114 = vld [vmem:[%s3 + $0x18] sm:$0xf]
    %v115 = vld [vmem:[%s3 + $0x1c] sm:$0xf]
    %v116 = vld [vmem:[%s3 + $0x20] sm:$0xf]
    %v117 = vld [vmem:[%s3 + $0x24] sm:$0xf]
    %v118 = vld [vmem:[%s3 + $0x28] sm:$0xf]
    %v119 = vld [vmem:[%s3 + $0x2c] sm:$0xf]
    %v120 = vld [vmem:[%s3 + $0x30] sm:$0xf]
    %v121 = vld [vmem:[%s3 + $0x34] sm:$0xf]
    %v122 = vld [vmem:[%s3 + $0x38] sm:$0xf]
    %v123 = vld [vmem:[%s3 + $0x3c] sm:$0xf]
    %v124 = vld [vmem:[%s4] sm:$0x1]
    %v126 = vlaneseq
    %v127 = vshrl.u32 %v126, 7
    %v128 = vsub.s32 0, %v127
    %v129 = vrot.slane %v124, %v128
    %v147 = vunpack.c.l.b16 %v108
    %v148 = vunpack.c.l.b16 %v109
    %v149 = vunpack.c.l.b16 %v110
    %v150 = vunpack.c.l.b16 %v111
    %v151 = vunpack.c.l.b16 %v112
    %v152 = vunpack.c.l.b16 %v113
    %v153 = vunpack.c.l.b16 %v114
    %v154 = vunpack.c.l.b16 %v115
    %v155 = vunpack.c.l.b16 %v116
    %v156 = vunpack.c.l.b16 %v117
    %v157 = vunpack.c.l.b16 %v118
    %v158 = vunpack.c.l.b16 %v119
    %v159 = vunpack.c.l.b16 %v120
    %v160 = vunpack.c.l.b16 %v121
    %v161 = vunpack.c.l.b16 %v122
    %v162 = vunpack.c.l.b16 %v123
    %v163 = vpack.c.b16 %v148, %v147
    %v164 = vpack.c.b16 %v150, %v149
    %v165 = vpack.c.b16 %v152, %v151
    %v166 = vpack.c.b16 %v154, %v153
    %v167 = vpack.c.b16 %v156, %v155
    %v168 = vpack.c.b16 %v158, %v157
    %v169 = vpack.c.b16 %v160, %v159
    %v170 = vpack.c.b16 %v162, %v161
    %179 = vmatprep.subr.bf16.mxu0 0
    %180 = vmatpush1.bf16.msra.mxu0 %v163
    %181 = vmatprep.subr.bf16.mxu0 0
    %182 = vmatpush1.bf16.msra.mxu0 %v164
    %183 = vmatprep.subr.bf16.mxu0 0
    %184 = vmatpush1.bf16.msra.mxu0 %v165
    %185 = vmatprep.subr.bf16.mxu0 0
    %186 = vmatpush1.bf16.msra.mxu0 %v166
    %187 = vmatprep.subr.bf16.mxu0 0
    %188 = vmatpush1.bf16.msra.mxu0 %v167
    %189 = vmatprep.subr.bf16.mxu0 0
    %190 = vmatpush1.bf16.msra.mxu0 %v168
    %191 = vmatprep.subr.bf16.mxu0 0
    %192 = vmatpush1.bf16.msra.mxu0 %v169
    %193 = vmatprep.subr.bf16.mxu0 0
    %194 = vmatpush1.bf16.msra.mxu0 %v170
    %195 = vmatprep.subr.bf16.mxu0 0
    %196 = vmatpush1.bf16.msra.mxu0 0
    %197 = vmatprep.subr.bf16.mxu0 0
    %198 = vmatpush1.bf16.msra.mxu0 0
    %199 = vmatprep.subr.bf16.mxu0 0
    %200 = vmatpush1.bf16.msra.mxu0 0
    %201 = vmatprep.subr.bf16.mxu0 0
    %202 = vmatpush1.bf16.msra.mxu0 0
    %203 = vmatprep.subr.bf16.mxu0 0
    %204 = vmatpush1.bf16.msra.mxu0 0
    %205 = vmatprep.subr.bf16.mxu0 0
    %206 = vmatpush1.bf16.msra.mxu0 0
    %207 = vmatprep.subr.bf16.mxu0 0
    %208 = vmatpush1.bf16.msra.mxu0 0
    %209 = vmatprep.subr.bf16.mxu0 0
    %210 = vmatpush1.bf16.msra.mxu0 0
    %211 = vmatprep.mubr.bf16.mxu0 0
    %212 = vmatmul.mubr.bf16.gmra.mrb[0].mxu0 %v107
    %v213 = vpop.f32.mrb[0].mxu0
    %v214 = vadd.f32 %v129, %v213
    %v215 = vpop.f32.mrb[0].mxu0
    %v216 = vpop.f32.mrb[0].mxu0
    %v217 = vadd.f32 %v129, %v216
    %v218 = vpop.f32.mrb[0].mxu0
    %219 = vdwg.mxu0
    %220 = vst.msk [vmem:[#allocation2] sm:$0xff] %vm52, %v214
    %221 = vst.msk [vmem:[#allocation2 + $0x8] sm:$0xff] %vm52, %v217
    // Predicated region
    $region22: #{tpu_custom_call.1} parent=1 // pred_check
      _
    $region23: #{tpu_custom_call.1} parent=1 // pred_check_branch
      %223 = sbr.rel (0) target = $region25
    $region24: #{tpu_custom_call.1} parent=1 // pred_region
      %s225 = ssub.s32 256, 256
      %226 = vsyncadd [#allocation3], %s225
      %s227 = sshll.u32 [#allocation2], 4
      %s228 = int_to_ptr.vmem [resolvable:$true] %s227
      %233 = dma.vmem_to_hbm [thread:$0]  %s228, 256, %s5, [#allocation3], 128, 128, 8
    $region25: #{tpu_custom_call.1} parent=1 // pred_fallthru
      _
    // Predicated region
    $region26: #{tpu_custom_call.1} parent=1 // pred_check
      _
    $region27: #{tpu_custom_call.1} parent=1 // pred_check_branch
      %235 = sbr.rel (0) target = $region29
    $region28: #{tpu_custom_call.1} parent=1 // pred_region
      %236 = dma.done [#allocation3], 256
    $region29: #{tpu_custom_call.1} parent=1 // pred_fallthru
      _
    %237 = vsyncpa [#allocation3], 1

</llo_original>
